<compile_context>
chip_gen: v5e
topology: v5e:2x2
jax: 0.10.0
libtpu: 0.0.40
codegen_flags: <defaults>
</compile_context>

<pallas_src>
import jax
import jax.numpy as jnp
from jax.experimental import pallas as pl
from jax.experimental.pallas import tpu as pltpu

LANE = 128
SUBLANE = 8
_TILE_B_MAX = 2048      # big enough for v5e/v6e overhead amortization, safe on v7x VMEM
_MIN_GRID_STEPS = 2     # >= 2 grid steps so both v7x TensorCores get work


def _round_up(n, m):
    return ((n + m - 1) // m) * m


def mlp_kernel(x_ref, w1_ref, b1_ref, w2_ref, b2_ref, w3t_ref, b3_ref, o_ref):
    # Layer 1: (tile_b, n_in) @ (n_in, 128) -> f32 accumulate, + bias, sigmoid.
    z1 = jnp.dot(x_ref[...], w1_ref[...], preferred_element_type=jnp.float32)
    z1 = z1 + b1_ref[...]
    h1 = 0.5 * jnp.tanh(0.5 * z1) + 0.5        # sigmoid: single EUP op per element

    # Layer 2: (tile_b, 128) @ (128, 128)
    z2 = jnp.dot(h1.astype(w2_ref.dtype), w2_ref[...],
                 preferred_element_type=jnp.float32)
    z2 = z2 + b2_ref[...]
    h2 = 0.5 * jnp.tanh(0.5 * z2) + 0.5

    # Layer 3, transposed: W3^T (8, 128) contracted with h2 (tile_b, 128) on the
    # last dim -> (8, tile_b).  Lane-dense store over the batch dim; only
    # 8 sublanes of output per tile instead of 128 lanes per batch row.
    z3 = jax.lax.dot_general(
        w3t_ref[...], h2.astype(w3t_ref.dtype),
        dimension_numbers=(((1,), (1,)), ((), ())),
        preferred_element_type=jnp.float32)
    o_ref[...] = (z3 + b3_ref[...]).astype(o_ref.dtype)   # b3 is (8,1), lane-broadcast


def mlp_forward(x, packed_params, n_out=3, compute_dtype=jnp.bfloat16):
    """Fused MLP forward. x: (B, n_inputs) float32 -> (B, n_out) float32."""
    w1, b1, w2, b2, w3t, b3 = packed_params
    B, n_in = x.shape
    out_rows = w3t.shape[0]        # n_out padded up to a multiple of 8 sublanes

    # Grid sizing from a step count (not min(TILE, B)): bounds padding waste and
    # guarantees an even number of steps for the v7x two-TensorCore split.
    steps = max(_MIN_GRID_STEPS, pl.cdiv(B, _TILE_B_MAX))
    steps += steps % 2
    # tile_b is the *lane* dim of the transposed output store, so keep it a
    # multiple of 128 for an unmasked, lane-dense vst.
    tile_b = _round_up(pl.cdiv(B, steps), LANE)
    b_pad = steps * tile_b
    if b_pad != B:
        x = jnp.zeros((b_pad, n_in), x.dtype).at[:B].set(x)

    # Matmul operands in the compute dtype (bf16 MXU fast path on every
    # generation); biases and accumulation stay f32.
    x = x.astype(compute_dtype)
    w1, w2, w3t = (w.astype(compute_dtype) for w in (w1, w2, w3t))

    def const(shape):   # grid-invariant operand: DMA'd once, resident in VMEM
        return pl.BlockSpec(shape, lambda i: (0, 0))

    out = pl.pallas_call(
        mlp_kernel,
        out_shape=jax.ShapeDtypeStruct((out_rows, b_pad), jnp.float32),
        grid=(steps,),
        in_specs=[
            pl.BlockSpec((tile_b, n_in), lambda i: (i, 0)),   # x: tiled on batch
            const(w1.shape), const(b1.shape),                 # weights resident
            const(w2.shape), const(b2.shape),
            const(w3t.shape), const(b3.shape),
        ],
        out_specs=pl.BlockSpec((out_rows, tile_b), lambda i: (0, i)),
        compiler_params=pltpu.CompilerParams(
            dimension_semantics=("parallel",),     # shard batch steps across TCs (v7x)
            vmem_limit_bytes=32 * 1024 * 1024,     # scaled for tile_b=2048; within v7x scoped limit
        ),
    )(x, w1, b1, w2, b2, w3t, b3)

    # Transposed, padded output (out_rows, b_pad) -> (B, n_out).  This touches
    # only ~32 B/row; call under jit so XLA fuses it with the consumer.
    return out[:n_out, :B].T


# ----------------------------- parameter setup ------------------------------

def xavier_uniform(key, fan_in, fan_out):
    # Matches torch.nn.init.xavier_uniform_ (gain=1): U(-a, a), a=sqrt(6/(fan_in+fan_out)).
    a = float(jnp.sqrt(6.0 / (fan_in + fan_out)))
    return jax.random.uniform(key, (fan_in, fan_out), jnp.float32, -a, a)


def linear_bias_init(key, fan_in, fan_out):
    # Matches PyTorch Linear default bias init: U(-1/sqrt(fan_in), 1/sqrt(fan_in)).
    bound = 1.0 / float(jnp.sqrt(jnp.float32(fan_in)))
    return jax.random.uniform(key, (fan_out,), jnp.float32, -bound, bound)


def init_params(key, n_inputs, h1=100, h2=30, n_out=3):
    ks = jax.random.split(key, 6)
    return (
        xavier_uniform(ks[0], n_inputs, h1), linear_bias_init(ks[1], n_inputs, h1),
        xavier_uniform(ks[2], h1, h2),       linear_bias_init(ks[3], h1, h2),
        xavier_uniform(ks[4], h2, n_out),    linear_bias_init(ks[5], h2, n_out),
    )


def _pad2d(a, rows, cols):
    return jnp.zeros((rows, cols), a.dtype).at[: a.shape[0], : a.shape[1]].set(a)


def pack_params(raw_params):
    """Zero-pad hidden widths to multiples of 128 lanes (lane-aligned MXU
    operands) and pre-transpose the last layer so its output rows map to
    sublanes (padded to 8) and the batch maps to lanes."""
    w1, b1, w2, b2, w3, b3 = raw_params
    n_in = w1.shape[0]
    d1 = _round_up(w1.shape[1], LANE)
    d2 = _round_up(w2.shape[1], LANE)
    d3 = _round_up(w3.shape[1], SUBLANE)     # output rows -> sublane padding only
    return (
        _pad2d(w1, n_in, d1), _pad2d(b1.reshape(1, -1), 1, d1),
        _pad2d(w2, d1, d2),   _pad2d(b2.reshape(1, -1), 1, d2),
        _pad2d(w3.T, d3, d2), _pad2d(b3.reshape(-1, 1), d3, 1),
    )


def mlp_reference(x, raw_params):
    w1, b1, w2, b2, w3, b3 = raw_params
    h1 = jax.nn.sigmoid(x @ w1 + b1)
    h2 = jax.nn.sigmoid(h1 @ w2 + b2)
    return h2 @ w3 + b3


if __name__ == "__main__":
    key = jax.random.PRNGKey(0)
    k_x, k_p = jax.random.split(key)

    batch = 8
    n_inputs = 16  # robot touch-sensor feature vector length

    x = jax.random.normal(k_x, (batch, n_inputs), jnp.float32)
    raw_params = init_params(k_p, n_inputs)
    packed_params = pack_params(raw_params)

    ref = mlp_reference(x, raw_params)

    # f32 compute path (strict-parity option).
    fwd_f32 = jax.jit(lambda xx: mlp_forward(xx, packed_params, n_out=3,
                                             compute_dtype=jnp.float32))
    out = jax.block_until_ready(fwd_f32(x))
    assert out.shape == (batch, 3)
    assert jnp.allclose(out, ref, atol=1e-2, rtol=1e-2), "f32 mismatch vs reference"

    # bf16 operand path (default; MXU fast path on all generations), f32 accumulation.
    fwd_bf16 = jax.jit(lambda xx: mlp_forward(xx, packed_params, n_out=3,
                                              compute_dtype=jnp.bfloat16))
    out_bf16 = jax.block_until_ready(fwd_bf16(x))
    assert out_bf16.shape == (batch, 3)
    assert jnp.allclose(out_bf16, ref, atol=7e-2, rtol=7e-2), "bf16 mismatch vs reference"

    print("KERNEL_OK")
</pallas_src>

<mosaic_0001>
module attributes {stable_mosaic.version = 11 : i64} {
  func.func @mlp_kernel(%arg0: i32, %arg1: memref<128x16xf32, #tpu.memory_space<vmem>>, %arg2: memref<16x128xf32, #tpu.memory_space<vmem>>, %arg3: memref<1x128xf32, #tpu.memory_space<vmem>>, %arg4: memref<128x128xf32, #tpu.memory_space<vmem>>, %arg5: memref<1x128xf32, #tpu.memory_space<vmem>>, %arg6: memref<8x128xf32, #tpu.memory_space<vmem>>, %arg7: memref<8x1xf32, #tpu.memory_space<vmem>>, %arg8: memref<8x128xf32, #tpu.memory_space<vmem>>) attributes {dimension_semantics = [#tpu.dimension_semantics<parallel>], iteration_bounds = array<i64: 2>, scalar_prefetch = 0 : i64, scratch_operands = 0 : i64, tpu.core_type = #tpu.core_type<tc>, window_params = [{transform_indices = @transform_0, window_bounds = array<i64: 128, 16>}, {pipeline_mode = #tpu.pipeline_mode<synchronous>, transform_indices = @transform_1, window_bounds = array<i64: 16, 128>}, {pipeline_mode = #tpu.pipeline_mode<synchronous>, transform_indices = @transform_2, window_bounds = array<i64: 1, 128>}, {pipeline_mode = #tpu.pipeline_mode<synchronous>, transform_indices = @transform_3, window_bounds = array<i64: 128, 128>}, {pipeline_mode = #tpu.pipeline_mode<synchronous>, transform_indices = @transform_4, window_bounds = array<i64: 1, 128>}, {pipeline_mode = #tpu.pipeline_mode<synchronous>, transform_indices = @transform_5, window_bounds = array<i64: 8, 128>}, {pipeline_mode = #tpu.pipeline_mode<synchronous>, transform_indices = @transform_6, window_bounds = array<i64: 8, 1>}, {transform_indices = @transform_7, window_bounds = array<i64: 8, 128>}]} {
    %c0 = arith.constant 0 : index
    %c0_0 = arith.constant 0 : index
    %0 = vector.load %arg1[%c0, %c0_0] : memref<128x16xf32, #tpu.memory_space<vmem>>, vector<128x16xf32>
    %c0_1 = arith.constant 0 : index
    %c0_2 = arith.constant 0 : index
    %1 = vector.load %arg2[%c0_1, %c0_2] : memref<16x128xf32, #tpu.memory_space<vmem>>, vector<16x128xf32>
    %cst = arith.constant dense<0.000000e+00> : vector<128x128xf32>
    %2 = tpu.matmul %0, %1, %cst {dimension_numbers = #tpu.dot_dimension_numbers<[1], [0], [0], [1], [0, 0, 1, 1], [], []>} : vector<128x16xf32>, vector<16x128xf32>, vector<128x128xf32> -> vector<128x128xf32>
    %c0_3 = arith.constant 0 : index
    %c0_4 = arith.constant 0 : index
    %3 = vector.load %arg3[%c0_3, %c0_4] : memref<1x128xf32, #tpu.memory_space<vmem>>, vector<1x128xf32>
    %4 = vector.broadcast %3 : vector<1x128xf32> to vector<128x128xf32>
    %5 = arith.addf %2, %4 : vector<128x128xf32>
    %cst_5 = arith.constant 5.000000e-01 : f32
    %6 = vector.broadcast %cst_5 : f32 to vector<128x128xf32>
    %7 = arith.mulf %6, %5 : vector<128x128xf32>
    %8 = math.tanh %7 : vector<128x128xf32>
    %cst_6 = arith.constant 5.000000e-01 : f32
    %9 = vector.broadcast %cst_6 : f32 to vector<128x128xf32>
    %10 = arith.mulf %9, %8 : vector<128x128xf32>
    %cst_7 = arith.constant 5.000000e-01 : f32
    %11 = vector.broadcast %cst_7 : f32 to vector<128x128xf32>
    %12 = arith.addf %10, %11 : vector<128x128xf32>
    %c0_8 = arith.constant 0 : index
    %c0_9 = arith.constant 0 : index
    %13 = vector.load %arg4[%c0_8, %c0_9] : memref<128x128xf32, #tpu.memory_space<vmem>>, vector<128x128xf32>
    %cst_10 = arith.constant dense<0.000000e+00> : vector<128x128xf32>
    %14 = tpu.matmul %12, %13, %cst_10 {dimension_numbers = #tpu.dot_dimension_numbers<[1], [0], [0], [1], [0, 0, 1, 1], [], []>} : vector<128x128xf32>, vector<128x128xf32>, vector<128x128xf32> -> vector<128x128xf32>
    %c0_11 = arith.constant 0 : index
    %c0_12 = arith.constant 0 : index
    %15 = vector.load %arg5[%c0_11, %c0_12] : memref<1x128xf32, #tpu.memory_space<vmem>>, vector<1x128xf32>
    %16 = vector.broadcast %15 : vector<1x128xf32> to vector<128x128xf32>
    %17 = arith.addf %14, %16 : vector<128x128xf32>
    %cst_13 = arith.constant 5.000000e-01 : f32
    %18 = vector.broadcast %cst_13 : f32 to vector<128x128xf32>
    %19 = arith.mulf %18, %17 : vector<128x128xf32>
    %20 = math.tanh %19 : vector<128x128xf32>
    %cst_14 = arith.constant 5.000000e-01 : f32
    %21 = vector.broadcast %cst_14 : f32 to vector<128x128xf32>
    %22 = arith.mulf %21, %20 : vector<128x128xf32>
    %cst_15 = arith.constant 5.000000e-01 : f32
    %23 = vector.broadcast %cst_15 : f32 to vector<128x128xf32>
    %24 = arith.addf %22, %23 : vector<128x128xf32>
    %c0_16 = arith.constant 0 : index
    %c0_17 = arith.constant 0 : index
    %25 = vector.load %arg6[%c0_16, %c0_17] : memref<8x128xf32, #tpu.memory_space<vmem>>, vector<8x128xf32>
    %cst_18 = arith.constant dense<0.000000e+00> : vector<8x128xf32>
    %26 = tpu.matmul %25, %24, %cst_18 {dimension_numbers = #tpu.dot_dimension_numbers<[1], [1], [0], [0], [0, 0, 1, 0], [], []>} : vector<8x128xf32>, vector<128x128xf32>, vector<8x128xf32> -> vector<8x128xf32>
    %c0_19 = arith.constant 0 : index
    %c0_20 = arith.constant 0 : index
    %27 = vector.load %arg7[%c0_19, %c0_20] : memref<8x1xf32, #tpu.memory_space<vmem>>, vector<8x1xf32>
    %28 = vector.broadcast %27 : vector<8x1xf32> to vector<8x128xf32>
    %29 = arith.addf %26, %28 : vector<8x128xf32>
    %c0_21 = arith.constant 0 : index
    %c0_22 = arith.constant 0 : index
    %30 = vector.load %arg8[%c0_21, %c0_22] : memref<8x128xf32, #tpu.memory_space<vmem>>, vector<8x128xf32>
    tpu.vector_store %arg8[%c0_21, %c0_22], %29 {strides = array<i32>} : memref<8x128xf32, #tpu.memory_space<vmem>>, vector<8x128xf32>,
    return
  }
  func.func @transform_0(%arg0: i32) -> (i32, i32) {
    %c0_i32 = arith.constant 0 : i32
    %c0_i32_0 = arith.constant 0 : i32
    return %arg0, %c0_i32 : i32, i32
  }
  func.func @transform_1(%arg0: i32) -> (i32, i32) {
    %c0_i32 = arith.constant 0 : i32
    %c0_i32_0 = arith.constant 0 : i32
    %c0_i32_1 = arith.constant 0 : i32
    return %c0_i32, %c0_i32_0 : i32, i32
  }
  func.func @transform_2(%arg0: i32) -> (i32, i32) {
    %c0_i32 = arith.constant 0 : i32
    %c0_i32_0 = arith.constant 0 : i32
    %c0_i32_1 = arith.constant 0 : i32
    return %c0_i32, %c0_i32_0 : i32, i32
  }
  func.func @transform_3(%arg0: i32) -> (i32, i32) {
    %c0_i32 = arith.constant 0 : i32
    %c0_i32_0 = arith.constant 0 : i32
    %c0_i32_1 = arith.constant 0 : i32
    return %c0_i32, %c0_i32_0 : i32, i32
  }
  func.func @transform_4(%arg0: i32) -> (i32, i32) {
    %c0_i32 = arith.constant 0 : i32
    %c0_i32_0 = arith.constant 0 : i32
    %c0_i32_1 = arith.constant 0 : i32
    return %c0_i32, %c0_i32_0 : i32, i32
  }
  func.func @transform_5(%arg0: i32) -> (i32, i32) {
    %c0_i32 = arith.constant 0 : i32
    %c0_i32_0 = arith.constant 0 : i32
    %c0_i32_1 = arith.constant 0 : i32
    return %c0_i32, %c0_i32_0 : i32, i32
  }
  func.func @transform_6(%arg0: i32) -> (i32, i32) {
    %c0_i32 = arith.constant 0 : i32
    %c0_i32_0 = arith.constant 0 : i32
    %c0_i32_1 = arith.constant 0 : i32
    return %c0_i32, %c0_i32_0 : i32, i32
  }
  func.func @transform_7(%arg0: i32) -> (i32, i32) {
    %c0_i32 = arith.constant 0 : i32
    %c0_i32_0 = arith.constant 0 : i32
    return %c0_i32, %arg0 : i32, i32
  }
}

</mosaic_0001>

<llo_original>
// kernel: _lambda_.1
$region0: #{_lambda_.1}
  #allocation0 [shape = 'u32[]', space=smem, size = 0x4, offset = 0x4, fixed_abs, tag = 'smem constant byte address 0x4 - core index']
  #allocation1 [shape = 'u32[72,128]{1,0:T(1,128)}', space=vmem, size = 0x9000, scoped, tag = 'internal scratch']
  %s0 = inlined_call_operand.vmem [shape: f32[256,16], index: 0, kind: input, shape index: {}]
  %s1 = inlined_call_operand.vmem [shape: f32[16,128], index: 1, kind: input, shape index: {}]
  %s2 = inlined_call_operand.vmem [shape: f32[1,128], index: 2, kind: input, shape index: {}]
  %s3 = inlined_call_operand.vmem [shape: f32[128,128], index: 3, kind: input, shape index: {}]
  %s4 = inlined_call_operand.vmem [shape: f32[1,128], index: 4, kind: input, shape index: {}]
  %s5 = inlined_call_operand.vmem [shape: f32[8,128], index: 5, kind: input, shape index: {}]
  %s6 = inlined_call_operand.vmem [shape: f32[8,1], index: 6, kind: input, shape index: {}]
  %s7 = inlined_call_operand.vmem [shape: f32[8,256], index: 7, kind: output, shape index: {}]
  %s8 = sld [smem:[#allocation0]]
  $region61: #{_lambda_.1} parent=0
    _
  %s10 = ssub.s32 1, %s8
  %s11 = scalar_select 0, %s10, %s8
  loop: start=0, step=1, limit=4
  $region2: #{_lambda_.1} parent=0 // loop_pre_header
    _
  $region3: #{_lambda_.1} parent=0 // loop_header
    %s13 = sphi 0, %s17
    %p14 = scmp.ge.s32.totalorder %s13, 4
    %s23 = sphi 0, %s25
    %s26 = sphi 0, %s23
    %s27 = sphi 0, %s26
    %s43 = sphi 0, %s27
    %s47 = sphi 0, %s47
    %s49 = sphi 0, %s47
    %s50 = sphi 0, %s49
    %s64 = sphi 0, %s50
    %s68 = sphi 0, %s68
    %s70 = sphi 0, %s68
    %s71 = sphi 0, %s70
    %s85 = sphi 0, %s71
    %s89 = sphi 0, %s89
    %s91 = sphi 0, %s89
    %s92 = sphi 0, %s91
    %s106 = sphi 0, %s92
    %s110 = sphi 0, %s110
    %s112 = sphi 0, %s110
    %s113 = sphi 0, %s112
    %s127 = sphi 0, %s113
    %s131 = sphi 0, %s131
    %s133 = sphi 0, %s131
    %s134 = sphi 0, %s133
    %s148 = sphi 0, %s134
    %s152 = sphi 0, %s152
    %s154 = sphi 0, %s152
    %s155 = sphi 0, %s154
    %s169 = sphi 0, %s155
    %s175 = sphi 0, %s177
    %s178 = sphi 0, %s175
    %s179 = sphi 0, %s178
    %s195 = sphi 0, %s179
  $region4: #{_lambda_.1} parent=0 // loop_header_branch
    %16 = sbr.rel (%p14) target = $region8
  $region5: #{_lambda_.1} parent=0 // loop_body
    %s18 = ssub.s32 %s13, 1
    %s19 = ssub.s32 %s13, 2
    %s20 = sadd.s32 %s13, 1
    %s21 = ssub.s32 %s13, %s20
    %p22 = scmp.eq.s32.totalorder %s21, 0
    %s24 = sadd.s32 %s23, 1
    %s25 = scalar_select %p22, %s23, %s24
    %p28 = pneg %p22
    %p29 = scmp.eq.s32.totalorder %s13, 1
    %p30 = por %p28, %p29
    %p31 = scmp.ne.s32.totalorder %s23, %s26
    %p32 = scmp.eq.s32.totalorder %s13, 0
    %p33 = por %p31, %p32
    %p34 = scmp.ne.s32.totalorder %s23, %s26
    %p35 = scmp.eq.s32.totalorder %s18, 1
    %p36 = por %p34, %p35
    %p37 = scmp.ne.s32.totalorder %s26, %s27
    %p38 = scmp.eq.s32.totalorder %s18, 0
    %p39 = por %p37, %p38
    %p40 = scmp.ne.s32.totalorder %s26, %s27
    %p41 = scmp.eq.s32.totalorder %s19, 1
    %p42 = por %p40, %p41
    %p44 = scmp.ne.s32.totalorder %s27, %s43
    %p45 = scmp.eq.s32.totalorder %s19, 0
    %p46 = por %p44, %p45
    %s48 = sadd.s32 %s47, 1
    %p51 = scmp.eq.s32.totalorder %s13, 1
    %p52 = scmp.ne.s32.totalorder %s47, %s49
    %p53 = scmp.eq.s32.totalorder %s13, 0
    %p54 = por %p52, %p53
    %p55 = scmp.ne.s32.totalorder %s47, %s49
    %p56 = scmp.eq.s32.totalorder %s18, 1
    %p57 = por %p55, %p56
    %p58 = scmp.ne.s32.totalorder %s49, %s50
    %p59 = scmp.eq.s32.totalorder %s18, 0
    %p60 = por %p58, %p59
    %p61 = scmp.ne.s32.totalorder %s49, %s50
    %p62 = scmp.eq.s32.totalorder %s19, 1
    %p63 = por %p61, %p62
    %p65 = scmp.ne.s32.totalorder %s50, %s64
    %p66 = scmp.eq.s32.totalorder %s19, 0
    %p67 = por %p65, %p66
    %s69 = sadd.s32 %s68, 1
    %p72 = scmp.eq.s32.totalorder %s13, 1
    %p73 = scmp.ne.s32.totalorder %s68, %s70
    %p74 = scmp.eq.s32.totalorder %s13, 0
    %p75 = por %p73, %p74
    %p76 = scmp.ne.s32.totalorder %s68, %s70
    %p77 = scmp.eq.s32.totalorder %s18, 1
    %p78 = por %p76, %p77
    %p79 = scmp.ne.s32.totalorder %s70, %s71
    %p80 = scmp.eq.s32.totalorder %s18, 0
    %p81 = por %p79, %p80
    %p82 = scmp.ne.s32.totalorder %s70, %s71
    %p83 = scmp.eq.s32.totalorder %s19, 1
    %p84 = por %p82, %p83
    %p86 = scmp.ne.s32.totalorder %s71, %s85
    %p87 = scmp.eq.s32.totalorder %s19, 0
    %p88 = por %p86, %p87
    %s90 = sadd.s32 %s89, 1
    %p93 = scmp.eq.s32.totalorder %s13, 1
    %p94 = scmp.ne.s32.totalorder %s89, %s91
    %p95 = scmp.eq.s32.totalorder %s13, 0
    %p96 = por %p94, %p95
    %p97 = scmp.ne.s32.totalorder %s89, %s91
    %p98 = scmp.eq.s32.totalorder %s18, 1
    %p99 = por %p97, %p98
    %p100 = scmp.ne.s32.totalorder %s91, %s92
    %p101 = scmp.eq.s32.totalorder %s18, 0
    %p102 = por %p100, %p101
    %p103 = scmp.ne.s32.totalorder %s91, %s92
    %p104 = scmp.eq.s32.totalorder %s19, 1
    %p105 = por %p103, %p104
    %p107 = scmp.ne.s32.totalorder %s92, %s106
    %p108 = scmp.eq.s32.totalorder %s19, 0
    %p109 = por %p107, %p108
    %s111 = sadd.s32 %s110, 1
    %p114 = scmp.eq.s32.totalorder %s13, 1
    %p115 = scmp.ne.s32.totalorder %s110, %s112
    %p116 = scmp.eq.s32.totalorder %s13, 0
    %p117 = por %p115, %p116
    %p118 = scmp.ne.s32.totalorder %s110, %s112
    %p119 = scmp.eq.s32.totalorder %s18, 1
    %p120 = por %p118, %p119
    %p121 = scmp.ne.s32.totalorder %s112, %s113
    %p122 = scmp.eq.s32.totalorder %s18, 0
    %p123 = por %p121, %p122
    %p124 = scmp.ne.s32.totalorder %s112, %s113
    %p125 = scmp.eq.s32.totalorder %s19, 1
    %p126 = por %p124, %p125
    %p128 = scmp.ne.s32.totalorder %s113, %s127
    %p129 = scmp.eq.s32.totalorder %s19, 0
    %p130 = por %p128, %p129
    %s132 = sadd.s32 %s131, 1
    %p135 = scmp.eq.s32.totalorder %s13, 1
    %p136 = scmp.ne.s32.totalorder %s131, %s133
    %p137 = scmp.eq.s32.totalorder %s13, 0
    %p138 = por %p136, %p137
    %p139 = scmp.ne.s32.totalorder %s131, %s133
    %p140 = scmp.eq.s32.totalorder %s18, 1
    %p141 = por %p139, %p140
    %p142 = scmp.ne.s32.totalorder %s133, %s134
    %p143 = scmp.eq.s32.totalorder %s18, 0
    %p144 = por %p142, %p143
    %p145 = scmp.ne.s32.totalorder %s133, %s134
    %p146 = scmp.eq.s32.totalorder %s19, 1
    %p147 = por %p145, %p146
    %p149 = scmp.ne.s32.totalorder %s134, %s148
    %p150 = scmp.eq.s32.totalorder %s19, 0
    %p151 = por %p149, %p150
    %s153 = sadd.s32 %s152, 1
    %p156 = scmp.eq.s32.totalorder %s13, 1
    %p157 = scmp.ne.s32.totalorder %s152, %s154
    %p158 = scmp.eq.s32.totalorder %s13, 0
    %p159 = por %p157, %p158
    %p160 = scmp.ne.s32.totalorder %s152, %s154
    %p161 = scmp.eq.s32.totalorder %s18, 1
    %p162 = por %p160, %p161
    %p163 = scmp.ne.s32.totalorder %s154, %s155
    %p164 = scmp.eq.s32.totalorder %s18, 0
    %p165 = por %p163, %p164
    %p166 = scmp.ne.s32.totalorder %s154, %s155
    %p167 = scmp.eq.s32.totalorder %s19, 1
    %p168 = por %p166, %p167
    %p170 = scmp.ne.s32.totalorder %s155, %s169
    %p171 = scmp.eq.s32.totalorder %s19, 0
    %p172 = por %p170, %p171
    %s173 = ssub.s32 %s13, %s20
    %p174 = scmp.eq.s32.totalorder %s173, 0
    %s176 = sadd.s32 %s175, 1
    %s177 = scalar_select %p174, %s175, %s176
    %p180 = pneg %p174
    %p181 = scmp.eq.s32.totalorder %s13, 1
    %p182 = por %p180, %p181
    %p183 = scmp.ne.s32.totalorder %s175, %s178
    %p184 = scmp.eq.s32.totalorder %s13, 0
    %p185 = por %p183, %p184
    %p186 = scmp.ne.s32.totalorder %s175, %s178
    %p187 = scmp.eq.s32.totalorder %s18, 1
    %p188 = por %p186, %p187
    %p189 = scmp.ne.s32.totalorder %s178, %s179
    %p190 = scmp.eq.s32.totalorder %s18, 0
    %p191 = por %p189, %p190
    %p192 = scmp.ne.s32.totalorder %s178, %s179
    %p193 = scmp.eq.s32.totalorder %s19, 1
    %p194 = por %p192, %p193
    %p196 = scmp.ne.s32.totalorder %s179, %s195
    %p197 = scmp.eq.s32.totalorder %s19, 0
    %p198 = por %p196, %p197
    %p199 = scmp.le.s32.totalorder 1, %s13
    %p200 = scmp.lt.s32.totalorder %s13, 3
    %p201 = pnand %p199, %p200
    %p202 = pneg %p201
    // Predicated region
    $region9: #{_lambda_.1} parent=5 // pred_check
      _
    $region10: #{_lambda_.1} parent=5 // pred_check_branch
      %204 = sbr.rel (%p201) target = $region12
    $region11: #{_lambda_.1} parent=5 // pred_region
      %s205 = ssub.s32 %s13, 1
      // Predicated region
      $region13: #{_lambda_.1} parent=11 // pred_check
        %p206 = pneg %p60
      $region14: #{_lambda_.1} parent=11 // pred_check_branch
        %208 = sbr.rel (%p206) target = $region16
      $region15: #{_lambda_.1} parent=11 // pred_region
        _
      $region16: #{_lambda_.1} parent=11 // pred_fallthru
        _
      // Predicated region
      $region17: #{_lambda_.1} parent=11 // pred_check
        %p209 = pneg %p81
      $region18: #{_lambda_.1} parent=11 // pred_check_branch
        %211 = sbr.rel (%p209) target = $region20
      $region19: #{_lambda_.1} parent=11 // pred_region
        _
      $region20: #{_lambda_.1} parent=11 // pred_fallthru
        _
      // Predicated region
      $region21: #{_lambda_.1} parent=11 // pred_check
        %p212 = pneg %p102
      $region22: #{_lambda_.1} parent=11 // pred_check_branch
        %214 = sbr.rel (%p212) target = $region24
      $region23: #{_lambda_.1} parent=11 // pred_region
        _
      $region24: #{_lambda_.1} parent=11 // pred_fallthru
        _
      // Predicated region
      $region25: #{_lambda_.1} parent=11 // pred_check
        %p215 = pneg %p123
      $region26: #{_lambda_.1} parent=11 // pred_check_branch
        %217 = sbr.rel (%p215) target = $region28
      $region27: #{_lambda_.1} parent=11 // pred_region
        _
      $region28: #{_lambda_.1} parent=11 // pred_fallthru
        _
      // Predicated region
      $region29: #{_lambda_.1} parent=11 // pred_check
        %p218 = pneg %p144
      $region30: #{_lambda_.1} parent=11 // pred_check_branch
        %220 = sbr.rel (%p218) target = $region32
      $region31: #{_lambda_.1} parent=11 // pred_region
        _
      $region32: #{_lambda_.1} parent=11 // pred_fallthru
        _
      // Predicated region
      $region33: #{_lambda_.1} parent=11 // pred_check
        %p221 = pneg %p165
      $region34: #{_lambda_.1} parent=11 // pred_check_branch
        %223 = sbr.rel (%p221) target = $region36
      $region35: #{_lambda_.1} parent=11 // pred_region
        _
      $region36: #{_lambda_.1} parent=11 // pred_fallthru
        _
    $region12: #{_lambda_.1} parent=5 // pred_fallthru
      _
    %p224 = scmp.lt.s32.totalorder %s13, 2
    // Predicated region
    $region37: #{_lambda_.1} parent=5 // pred_check
      %p225 = pneg %p224
    $region38: #{_lambda_.1} parent=5 // pred_check_branch
      %227 = sbr.rel (%p225) target = $region40
    $region39: #{_lambda_.1} parent=5 // pred_region
      // Predicated region
      $region41: #{_lambda_.1} parent=39 // pred_check
        %p228 = pneg %p33
      $region42: #{_lambda_.1} parent=39 // pred_check_branch
        %230 = sbr.rel (%p228) target = $region44
      $region43: #{_lambda_.1} parent=39 // pred_region
        %s231 = smul.u32 16, %s13
        %p232 = scmp.lt.s32.totalorder %s231, 31
        %s233 = scalar_select %p232, %s231, 31
        %s234 = smul.addr %s233, 8
        %s235 = scalar_lea.vmem %s0, %s234
        %s236 = smul.u32 16, %s13
      $region44: #{_lambda_.1} parent=39 // pred_fallthru
        _
    $region40: #{_lambda_.1} parent=5 // pred_fallthru
      _
    %p237 = scmp.le.s32.totalorder 1, %s13
    %p238 = scmp.lt.s32.totalorder %s13, 3
    %p239 = pnand %p237, %p238
    %p240 = pneg %p239
    // Predicated region
    $region45: #{_lambda_.1} parent=5 // pred_check
      _
    $region46: #{_lambda_.1} parent=5 // pred_check_branch
      %242 = sbr.rel (%p239) target = $region48
    $region47: #{_lambda_.1} parent=5 // pred_region
      %s243 = ssub.s32 %s13, 1
      %s244 = smul.u32 16, %s18
      %p245 = scmp.lt.s32.totalorder %s244, 31
      %s246 = scalar_select %p245, %s244, 31
      %s247 = smul.addr %s246, 8
      %s248 = scalar_lea.vmem %s0, %s247
      %p249 = pneg %p39
      %p250 = pneg %p36
      %p251 = pneg %p60
      %p252 = pneg %p57
      %p253 = pneg %p81
      %p254 = pneg %p78
      %p255 = pneg %p102
      %p256 = pneg %p99
      %p257 = pneg %p123
      %p258 = pneg %p120
      %p259 = pneg %p144
      %p260 = pneg %p141
      %p261 = pneg %p165
      %p262 = pneg %p162
      %p263 = pneg %p191
      %p264 = pneg %p188
      %p265 = scmp.lt.s32.totalorder %s18, 1
      %s266 = scalar_select %p265, %s18, 1
      %s267 = smul.addr %s266, 8
      %s268 = scalar_lea.vmem %s7, %s267
      %s269 = smul.u32 16, %s18
      %p270 = scmp.lt.s32.totalorder %s269, 31
      %s271 = scalar_select %p270, %s269, 31
      %s272 = smul.addr %s271, 8
      %s273 = scalar_lea.vmem %s0, %s272
      %s274 = smul.u32 16, %s18
      %p275 = scmp.lt.s32.totalorder %s18, 1
      %s276 = scalar_select %p275, %s18, 1
      %s277 = smul.addr %s276, 8
      %s278 = scalar_lea.vmem %s7, %s277
      %v279 = vld [vmem:[%s273] sm:$0xff]
      %v280 = vld [vmem:[%s273 + $0x8] sm:$0xff]
      %v281 = vld [vmem:[%s273 + $0x10] sm:$0xff]
      %v282 = vld [vmem:[%s273 + $0x18] sm:$0xff]
      %v283 = vld [vmem:[%s273 + $0x20] sm:$0xff]
      %v284 = vld [vmem:[%s273 + $0x28] sm:$0xff]
      %v285 = vld [vmem:[%s273 + $0x30] sm:$0xff]
      %v286 = vld [vmem:[%s273 + $0x38] sm:$0xff]
      %v287 = vld [vmem:[%s273 + $0x40] sm:$0xff]
      %v288 = vld [vmem:[%s273 + $0x48] sm:$0xff]
      %v289 = vld [vmem:[%s273 + $0x50] sm:$0xff]
      %v290 = vld [vmem:[%s273 + $0x58] sm:$0xff]
      %v291 = vld [vmem:[%s273 + $0x60] sm:$0xff]
      %v292 = vld [vmem:[%s273 + $0x68] sm:$0xff]
      %v293 = vld [vmem:[%s273 + $0x70] sm:$0xff]
      %v294 = vld [vmem:[%s273 + $0x78] sm:$0xff]
      %v295 = vld [vmem:[%s1] sm:$0xff]
      %v296 = vld [vmem:[%s1 + $0x8] sm:$0xff]
      %v297 = vld [vmem:[%s2] sm:$0x1]
      %v299 = vperm.slane %v297, 0
      %vm301 = vcmask 130048
      %v303 = vsel %vm301, %v279, 0
      %v306 = vsel %vm301, %v280, 0
      %v309 = vsel %vm301, %v281, 0
      %v312 = vsel %vm301, %v282, 0
      %v315 = vsel %vm301, %v283, 0
      %v318 = vsel %vm301, %v284, 0
      %v321 = vsel %vm301, %v285, 0
      %v324 = vsel %vm301, %v286, 0
      %v327 = vsel %vm301, %v287, 0
      %v330 = vsel %vm301, %v288, 0
      %v333 = vsel %vm301, %v289, 0
      %v336 = vsel %vm301, %v290, 0
      %v339 = vsel %vm301, %v291, 0
      %v342 = vsel %vm301, %v292, 0
      %v345 = vsel %vm301, %v293, 0
      %v348 = vsel %vm301, %v294, 0
      %350 = vmatpush.msra.mxu0 0.0
      %351 = vmatpush.msra.mxu0 0.0
      %352 = vmatpush.msra.mxu0 0.0
      %353 = vmatpush.msra.mxu0 0.0
      %354 = vmatpush.msra.mxu0 0.0
      %355 = vmatpush.msra.mxu0 0.0
      %356 = vmatpush.msra.mxu0 0.0
      %357 = vmatpush.msra.mxu0 0.0
      %358 = vmatpush.msra.mxu0 0.0
      %359 = vmatpush.msra.mxu0 0.0
      %360 = vmatpush.msra.mxu0 0.0
      %361 = vmatpush.msra.mxu0 0.0
      %362 = vmatpush.msra.mxu0 0.0
      %363 = vmatpush.msra.mxu0 0.0
      %364 = vmatpush.msra.mxu0 %v296
      %365 = vmatpush.msra.mxu0 %v295
      %366 = vmatmul.f32.gmra.mxu0 %v303
      %v367 = vpop.f32.mrf.mxu0
      %v368 = vadd.f32 %v299, %v367
      %369 = vmatmul.f32.gmra.mxu0 %v306
      %v370 = vpop.f32.mrf.mxu0
      %v371 = vadd.f32 %v299, %v370
      %372 = vmatmul.f32.gmra.mxu0 %v309
      %v373 = vpop.f32.mrf.mxu0
      %v374 = vadd.f32 %v299, %v373
      %375 = vmatmul.f32.gmra.mxu0 %v312
      %v376 = vpop.f32.mrf.mxu0
      %v377 = vadd.f32 %v299, %v376
      %378 = vmatmul.f32.gmra.mxu0 %v315
      %v379 = vpop.f32.mrf.mxu0
      %v380 = vadd.f32 %v299, %v379
      %381 = vmatmul.f32.gmra.mxu0 %v318
      %v382 = vpop.f32.mrf.mxu0
      %v383 = vadd.f32 %v299, %v382
      %384 = vmatmul.f32.gmra.mxu0 %v321
      %v385 = vpop.f32.mrf.mxu0
      %v386 = vadd.f32 %v299, %v385
      %387 = vmatmul.f32.gmra.mxu0 %v324
      %v388 = vpop.f32.mrf.mxu0
      %v389 = vadd.f32 %v299, %v388
      %390 = vmatmul.f32.gmra.mxu0 %v327
      %v391 = vpop.f32.mrf.mxu0
      %v392 = vadd.f32 %v299, %v391
      %393 = vmatmul.f32.gmra.mxu0 %v330
      %v394 = vpop.f32.mrf.mxu0
      %v395 = vadd.f32 %v299, %v394
      %396 = vmatmul.f32.gmra.mxu0 %v333
      %v397 = vpop.f32.mrf.mxu0
      %v398 = vadd.f32 %v299, %v397
      %399 = vmatmul.f32.gmra.mxu0 %v336
      %v400 = vpop.f32.mrf.mxu0
      %v401 = vadd.f32 %v299, %v400
      %402 = vmatmul.f32.gmra.mxu0 %v339
      %v403 = vpop.f32.mrf.mxu0
      %v404 = vadd.f32 %v299, %v403
      %405 = vmatmul.f32.gmra.mxu0 %v342
      %v406 = vpop.f32.mrf.mxu0
      %v407 = vadd.f32 %v299, %v406
      %408 = vmatmul.f32.gmra.mxu0 %v345
      %v409 = vpop.f32.mrf.mxu0
      %v410 = vadd.f32 %v299, %v409
      %411 = vmatmul.f32.gmra.mxu0 %v348
      %v412 = vpop.f32.mrf.mxu0
      %v413 = vadd.f32 %v299, %v412
      %414 = vdwg.mxu0
      %v415 = vmul.f32 %v368, 0.5
      %v416 = vmul.f32 %v371, 0.5
      %v417 = vmul.f32 %v374, 0.5
      %v418 = vmul.f32 %v377, 0.5
      %v419 = vmul.f32 %v380, 0.5
      %v420 = vmul.f32 %v383, 0.5
      %v421 = vmul.f32 %v386, 0.5
      %v422 = vmul.f32 %v389, 0.5
      %v423 = vmul.f32 %v392, 0.5
      %v424 = vmul.f32 %v395, 0.5
      %v425 = vmul.f32 %v398, 0.5
      %v426 = vmul.f32 %v401, 0.5
      %v427 = vmul.f32 %v404, 0.5
      %v428 = vmul.f32 %v407, 0.5
      %v429 = vmul.f32 %v410, 0.5
      %v430 = vmul.f32 %v413, 0.5
      %v431 = vtanh.pop %v415
      %v432 = vtanh.pop %v416
      %v433 = vtanh.pop %v417
      %v434 = vtanh.pop %v418
      %v435 = vtanh.pop %v419
      %v436 = vtanh.pop %v420
      %v437 = vtanh.pop %v421
      %v438 = vtanh.pop %v422
      %v439 = vtanh.pop %v423
      %v440 = vtanh.pop %v424
      %v441 = vtanh.pop %v425
      %v442 = vtanh.pop %v426
      %v443 = vtanh.pop %v427
      %v444 = vtanh.pop %v428
      %v445 = vtanh.pop %v429
      %v446 = vtanh.pop %v430
      %v447 = vmul.f32 %v431, 0.5
      %v448 = vmul.f32 %v432, 0.5
      %v449 = vmul.f32 %v433, 0.5
      %v450 = vmul.f32 %v434, 0.5
      %v451 = vmul.f32 %v435, 0.5
      %v452 = vmul.f32 %v436, 0.5
      %v453 = vmul.f32 %v437, 0.5
      %v454 = vmul.f32 %v438, 0.5
      %v455 = vmul.f32 %v439, 0.5
      %v456 = vmul.f32 %v440, 0.5
      %v457 = vmul.f32 %v441, 0.5
      %v458 = vmul.f32 %v442, 0.5
      %v459 = vmul.f32 %v443, 0.5
      %v460 = vmul.f32 %v444, 0.5
      %v461 = vmul.f32 %v445, 0.5
      %v462 = vmul.f32 %v446, 0.5
      %v463 = vadd.f32 %v447, 0.5
      %v464 = vadd.f32 %v448, 0.5
      %v465 = vadd.f32 %v449, 0.5
      %v466 = vadd.f32 %v450, 0.5
      %v467 = vadd.f32 %v451, 0.5
      %v468 = vadd.f32 %v452, 0.5
      %v469 = vadd.f32 %v453, 0.5
      %v470 = vadd.f32 %v454, 0.5
      %v471 = vadd.f32 %v455, 0.5
      %v472 = vadd.f32 %v456, 0.5
      %v473 = vadd.f32 %v457, 0.5
      %v474 = vadd.f32 %v458, 0.5
      %v475 = vadd.f32 %v459, 0.5
      %v476 = vadd.f32 %v460, 0.5
      %v477 = vadd.f32 %v461, 0.5
      %v478 = vadd.f32 %v462, 0.5
      %v479 = vld [vmem:[%s3] sm:$0xff]
      %v480 = vld [vmem:[%s3 + $0x8] sm:$0xff]
      %v481 = vld [vmem:[%s3 + $0x10] sm:$0xff]
      %v482 = vld [vmem:[%s3 + $0x18] sm:$0xff]
      %v483 = vld [vmem:[%s3 + $0x20] sm:$0xff]
      %v484 = vld [vmem:[%s3 + $0x28] sm:$0xff]
      %v485 = vld [vmem:[%s3 + $0x30] sm:$0xff]
      %v486 = vld [vmem:[%s3 + $0x38] sm:$0xff]
      %v487 = vld [vmem:[%s3 + $0x40] sm:$0xff]
      %v488 = vld [vmem:[%s3 + $0x48] sm:$0xff]
      %v489 = vld [vmem:[%s3 + $0x50] sm:$0xff]
      %v490 = vld [vmem:[%s3 + $0x58] sm:$0xff]
      %v491 = vld [vmem:[%s3 + $0x60] sm:$0xff]
      %v492 = vld [vmem:[%s3 + $0x68] sm:$0xff]
      %v493 = vld [vmem:[%s3 + $0x70] sm:$0xff]
      %v494 = vld [vmem:[%s3 + $0x78] sm:$0xff]
      %v495 = vld [vmem:[%s4] sm:$0x1]
      %v497 = vperm.slane %v495, 0
      %499 = vmatpush.msra.mxu0 %v494
      %500 = vmatpush.msra.mxu0 %v493
      %501 = vmatpush.msra.mxu0 %v492
      %502 = vmatpush.msra.mxu0 %v491
      %503 = vmatpush.msra.mxu0 %v490
      %504 = vmatpush.msra.mxu0 %v489
      %505 = vmatpush.msra.mxu0 %v488
      %506 = vmatpush.msra.mxu0 %v487
      %507 = vmatpush.msra.mxu0 %v486
      %508 = vmatpush.msra.mxu0 %v485
      %509 = vmatpush.msra.mxu0 %v484
      %510 = vmatpush.msra.mxu0 %v483
      %511 = vmatpush.msra.mxu0 %v482
      %512 = vmatpush.msra.mxu0 %v481
      %513 = vmatpush.msra.mxu0 %v480
      %514 = vmatpush.msra.mxu0 %v479
      %515 = vmatmul.f32.gmra.mxu0 %v463
      %v516 = vpop.f32.mrf.mxu0
      %v517 = vadd.f32 %v497, %v516
      %518 = vmatmul.f32.gmra.mxu0 %v464
      %v519 = vpop.f32.mrf.mxu0
      %v520 = vadd.f32 %v497, %v519
      %521 = vmatmul.f32.gmra.mxu0 %v465
      %v522 = vpop.f32.mrf.mxu0
      %v523 = vadd.f32 %v497, %v522
      %524 = vmatmul.f32.gmra.mxu0 %v466
      %v525 = vpop.f32.mrf.mxu0
      %v526 = vadd.f32 %v497, %v525
      %527 = vmatmul.f32.gmra.mxu0 %v467
      %v528 = vpop.f32.mrf.mxu0
      %v529 = vadd.f32 %v497, %v528
      %530 = vmatmul.f32.gmra.mxu0 %v468
      %v531 = vpop.f32.mrf.mxu0
      %v532 = vadd.f32 %v497, %v531
      %533 = vmatmul.f32.gmra.mxu0 %v469
      %v534 = vpop.f32.mrf.mxu0
      %v535 = vadd.f32 %v497, %v534
      %536 = vmatmul.f32.gmra.mxu0 %v470
      %v537 = vpop.f32.mrf.mxu0
      %v538 = vadd.f32 %v497, %v537
      %539 = vmatmul.f32.gmra.mxu0 %v471
      %v540 = vpop.f32.mrf.mxu0
      %v541 = vadd.f32 %v497, %v540
      %542 = vmatmul.f32.gmra.mxu0 %v472
      %v543 = vpop.f32.mrf.mxu0
      %v544 = vadd.f32 %v497, %v543
      %545 = vmatmul.f32.gmra.mxu0 %v473
      %v546 = vpop.f32.mrf.mxu0
      %v547 = vadd.f32 %v497, %v546
      %548 = vmatmul.f32.gmra.mxu0 %v474
      %v549 = vpop.f32.mrf.mxu0
      %v550 = vadd.f32 %v497, %v549
      %551 = vmatmul.f32.gmra.mxu0 %v475
      %v552 = vpop.f32.mrf.mxu0
      %v553 = vadd.f32 %v497, %v552
      %554 = vmatmul.f32.gmra.mxu0 %v476
      %v555 = vpop.f32.mrf.mxu0
      %v556 = vadd.f32 %v497, %v555
      %557 = vmatmul.f32.gmra.mxu0 %v477
      %v558 = vpop.f32.mrf.mxu0
      %v559 = vadd.f32 %v497, %v558
      %560 = vmatmul.f32.gmra.mxu0 %v478
      %v561 = vpop.f32.mrf.mxu0
      %v562 = vadd.f32 %v497, %v561
      %563 = vdwg.mxu0
      %v564 = vmul.f32 %v517, 0.5
      %v565 = vmul.f32 %v520, 0.5
      %v566 = vmul.f32 %v523, 0.5
      %v567 = vmul.f32 %v526, 0.5
      %v568 = vmul.f32 %v529, 0.5
      %v569 = vmul.f32 %v532, 0.5
      %v570 = vmul.f32 %v535, 0.5
      %v571 = vmul.f32 %v538, 0.5
      %v572 = vmul.f32 %v541, 0.5
      %v573 = vmul.f32 %v544, 0.5
      %v574 = vmul.f32 %v547, 0.5
      %v575 = vmul.f32 %v550, 0.5
      %v576 = vmul.f32 %v553, 0.5
      %v577 = vmul.f32 %v556, 0.5
      %v578 = vmul.f32 %v559, 0.5
      %v579 = vmul.f32 %v562, 0.5
      %v580 = vtanh.pop %v564
      %v581 = vtanh.pop %v565
      %v582 = vtanh.pop %v566
      %v583 = vtanh.pop %v567
      %v584 = vtanh.pop %v568
      %v585 = vtanh.pop %v569
      %v586 = vtanh.pop %v570
      %v587 = vtanh.pop %v571
      %v588 = vtanh.pop %v572
      %v589 = vtanh.pop %v573
      %v590 = vtanh.pop %v574
      %v591 = vtanh.pop %v575
      %v592 = vtanh.pop %v576
      %v593 = vtanh.pop %v577
      %v594 = vtanh.pop %v578
      %v595 = vtanh.pop %v579
      %v596 = vmul.f32 %v580, 0.5
      %v597 = vmul.f32 %v581, 0.5
      %v598 = vmul.f32 %v582, 0.5
      %v599 = vmul.f32 %v583, 0.5
      %v600 = vmul.f32 %v584, 0.5
      %v601 = vmul.f32 %v585, 0.5
      %v602 = vmul.f32 %v586, 0.5
      %v603 = vmul.f32 %v587, 0.5
      %v604 = vmul.f32 %v588, 0.5
      %v605 = vmul.f32 %v589, 0.5
      %v606 = vmul.f32 %v590, 0.5
      %v607 = vmul.f32 %v591, 0.5
      %v608 = vmul.f32 %v592, 0.5
      %v609 = vmul.f32 %v593, 0.5
      %v610 = vmul.f32 %v594, 0.5
      %v611 = vmul.f32 %v595, 0.5
      %v612 = vadd.f32 %v596, 0.5
      %v613 = vadd.f32 %v597, 0.5
      %v614 = vadd.f32 %v598, 0.5
      %v615 = vadd.f32 %v599, 0.5
      %v616 = vadd.f32 %v600, 0.5
      %v617 = vadd.f32 %v601, 0.5
      %v618 = vadd.f32 %v602, 0.5
      %v619 = vadd.f32 %v603, 0.5
      %v620 = vadd.f32 %v604, 0.5
      %v621 = vadd.f32 %v605, 0.5
      %v622 = vadd.f32 %v606, 0.5
      %v623 = vadd.f32 %v607, 0.5
      %v624 = vadd.f32 %v608, 0.5
      %v625 = vadd.f32 %v609, 0.5
      %v626 = vadd.f32 %v610, 0.5
      %v627 = vadd.f32 %v611, 0.5
      %v628 = vld [vmem:[%s5] sm:$0xff]
      %v629 = vld [vmem:[%s6] sm:$0xff]
      %631 = vset.pattern.permute.xlu0 0
      %632 = vperm.xlu0 %631, %v629
      %v633 = vpop.permute.xlu0 %632
      %635 = vmatpush.xpose.msra.mxu0 %v627
      %636 = vmatpush.xpose.msra.mxu0 %v626
      %637 = vmatpush.xpose.msra.mxu0 %v625
      %638 = vmatpush.xpose.msra.mxu0 %v624
      %639 = vmatpush.xpose.msra.mxu0 %v623
      %640 = vmatpush.xpose.msra.mxu0 %v622
      %641 = vmatpush.xpose.msra.mxu0 %v621
      %642 = vmatpush.xpose.msra.mxu0 %v620
      %643 = vmatpush.xpose.msra.mxu0 %v619
      %644 = vmatpush.xpose.msra.mxu0 %v618
      %645 = vmatpush.xpose.msra.mxu0 %v617
      %646 = vmatpush.xpose.msra.mxu0 %v616
      %647 = vmatpush.xpose.msra.mxu0 %v615
      %648 = vmatpush.xpose.msra.mxu0 %v614
      %649 = vmatpush.xpose.msra.mxu0 %v613
      %650 = vmatpush.xpose.msra.mxu0 %v612
      %651 = vmatmul.f32.gmra.mxu0 %v628
      %v652 = vpop.f32.mrf.mxu0
      %v653 = vadd.f32 %v633, %v652
      %654 = vdwg.mxu0
      %655 = vst [vmem:[%s278] sm:$0xff] %v653
      %p656 = scmp.lt.s32.totalorder %s18, 1
      %s657 = scalar_select %p656, %s18, 1
      %s658 = smul.addr %s657, 8
      %s659 = scalar_lea.vmem %s7, %s658
      // Predicated region
      $region49: #{_lambda_.1} parent=47 // pred_check
        %p660 = pneg %p188
      $region50: #{_lambda_.1} parent=47 // pred_check_branch
        %662 = sbr.rel (%p660) target = $region52
      $region51: #{_lambda_.1} parent=47 // pred_region
        _
      $region52: #{_lambda_.1} parent=47 // pred_fallthru
        _
    $region48: #{_lambda_.1} parent=5 // pred_fallthru
      _
    %p663 = scmp.le.s32.totalorder 2, %s13
    // Predicated region
    $region53: #{_lambda_.1} parent=5 // pred_check
      %p664 = pneg %p663
    $region54: #{_lambda_.1} parent=5 // pred_check_branch
      %666 = sbr.rel (%p664) target = $region56
    $region55: #{_lambda_.1} parent=5 // pred_region
      %s667 = ssub.s32 %s13, 2
      // Predicated region
      $region57: #{_lambda_.1} parent=55 // pred_check
        %p668 = pneg %p194
      $region58: #{_lambda_.1} parent=55 // pred_check_branch
        %670 = sbr.rel (%p668) target = $region60
      $region59: #{_lambda_.1} parent=55 // pred_region
        %p671 = scmp.lt.s32.totalorder %s19, 1
        %s672 = scalar_select %p671, %s19, 1
        %s673 = smul.addr %s672, 8
        %s674 = scalar_lea.vmem %s7, %s673
      $region60: #{_lambda_.1} parent=55 // pred_fallthru
        _
    $region56: #{_lambda_.1} parent=5 // pred_fallthru
      _
  $region6: #{_lambda_.1} parent=0 // loop_footer
    %s17 = sadd.s32 1, %s13
  $region7: #{_lambda_.1} parent=0 // loop_footer_branch
    %12 = sbr.rel target = $region3
  $region8: #{_lambda_.1} parent=0 // loop_exit
    _

</llo_original>
